<compile_context>
chip_gen: v7x
topology: tpu7x:2x2x1
jax: 0.10.0
libtpu: 0.0.40
codegen_flags: <defaults>
</compile_context>

<pallas_src>
import jax
import jax.numpy as jnp
from jax.experimental import pallas as pl
from jax.experimental.pallas import tpu as pltpu

# torchvision transforms.Normalize constants
_MEAN = (0.485, 0.456, 0.406)
_STD = (0.229, 0.224, 0.225)

NUM_CLASSES = 8

_SUB = 8      # sublane granularity
_LANE = 128   # lane granularity


def _row_sum_kernel(x_ref, o_ref):
    # x_ref: (TB*3, HW_BLK) lane-dense   o_ref: (TB*3, 1) accumulator
    # Pure sum-reduction; Normalize + pooling scale + dense head are linear
    # and folded into the epilogue outside the kernel.
    @pl.when(pl.program_id(1) == 0)
    def _():
        o_ref[...] = jnp.zeros_like(o_ref)

    o_ref[...] += jnp.sum(x_ref[...], axis=-1, keepdims=True)


def _round_up(a, b):
    return (a + b - 1) // b * b


def _vmem_config():
    """(vmem_limit_bytes, per-input-buffer budget, min batch grid steps)."""
    try:
        cap = int(pltpu.get_tpu_info().vmem_capacity_bytes)
    except Exception:
        cap = 64 * 1024 * 1024  # unknown -> assume the smallest (v7x-class)
    if cap <= 64 * 1024 * 1024:
        # v7x-class: 64 MiB physical VMEM per TC, 2 TCs per chip.
        return 48 * 1024 * 1024, 16 * 1024 * 1024, 2
    # v5e / v6e: 128 MiB physical VMEM, single TC.
    return 64 * 1024 * 1024, 24 * 1024 * 1024, 1


def _pick_tiling(n, hw, buf_budget, min_steps):
    """Choose (tb_images, n_padded, hw_blk, hw_padded)."""
    per_img_bytes = 3 * hw * 4  # f32, 3 channel-rows per image
    tb = max(_SUB, (buf_budget // max(per_img_bytes, 1)) // _SUB * _SUB)
    n8 = _round_up(n, _SUB)
    tb = min(tb, n8)
    # v7x: keep at least `min_steps` batch-grid steps so both TCs get work.
    if min_steps > 1 and n8 >= _SUB * min_steps:
        tb = min(tb, _round_up(-(-n8 // min_steps), _SUB))
    n_pad = _round_up(n, tb)

    # Spatial chunking only when even the minimal row-block blows the budget.
    if tb * per_img_bytes <= buf_budget or hw <= _LANE:
        hw_blk, hw_pad = hw, hw
    else:
        hw_blk = max(_LANE, (buf_budget // (tb * 3 * 4)) // _LANE * _LANE)
        hw_pad = _round_up(hw, hw_blk)
    return tb, n_pad, hw_blk, hw_pad


def normalized_forward(img, w, b):
    """img: (N, 3, H, W) float32; w: (3, C_out); b: (1, C_out) -> (N, C_out)."""
    N, C, H, W = img.shape
    assert C == 3, "ImageNet Normalize expects 3 channels"
    HW = H * W

    vmem_limit, buf_budget, min_steps = _vmem_config()
    TB, N_pad, HW_blk, HW_pad = _pick_tiling(N, HW, buf_budget, min_steps)

    # Dense 2-D layout: channel-rows on sublanes, spatial on lanes.
    x = img.reshape(N * C, HW)
    if N_pad != N or HW_pad != HW:
        # Zero padding is exact: padded rows are discarded, padded columns
        # add 0 to every row sum.
        x = jnp.pad(x, ((0, (N_pad - N) * C), (0, HW_pad - HW)))

    rows_blk = TB * C
    grid = (N_pad // TB, HW_pad // HW_blk)

    sums = pl.pallas_call(
        _row_sum_kernel,
        out_shape=jax.ShapeDtypeStruct((N_pad * C, 1), jnp.float32),
        grid_spec=pltpu.PrefetchScalarGridSpec(
            num_scalar_prefetch=0,
            grid=grid,
            in_specs=[pl.BlockSpec((rows_blk, HW_blk), lambda i, j: (i, j))],
            out_specs=pl.BlockSpec((rows_blk, 1), lambda i, j: (i, 0)),
        ),
        compiler_params=pltpu.CompilerParams(
            dimension_semantics=("parallel", "arbitrary"),
            vmem_limit_bytes=vmem_limit,
        ),
    )(x)

    sums = sums[: N * C, 0].reshape(N, C)

    # Epilogue (plain XLA, tiny): fold Normalize + 1/(H*W) + dense head.
    #   pooled_n = ((sums / HW) - mean) * inv_std
    #   logits   = pooled_n @ w + b
    # => logits = sums @ ((inv_std / HW)[:, None] * w) + (b - (mean*inv_std) @ w)
    # TODO(synk): the original `network` argument is arbitrary / not specified;
    # a deterministic mean-pool + linear head stands in for it. The fold is
    # valid because this synthetic network is linear.
    mean = jnp.asarray(_MEAN, jnp.float32)
    inv_std = 1.0 / jnp.asarray(_STD, jnp.float32)
    w_eff = (inv_std / HW)[:, None] * w          # (3, C_out)
    b_eff = b - (mean * inv_std) @ w             # (1, C_out)
    return sums @ w_eff + b_eff


def _reference(img, w, b):
    mean = jnp.asarray(_MEAN, jnp.float32).reshape(1, 3, 1, 1)
    std = jnp.asarray(_STD, jnp.float32).reshape(1, 3, 1, 1)
    xn = (img - mean) / std
    pooled = jnp.mean(xn, axis=(2, 3))
    return pooled @ w + b


if __name__ == "__main__":
    key = jax.random.PRNGKey(0)
    k_img, k_w, k_b = jax.random.split(key, 3)

    # small, deterministic example inputs: batch=2, channels=3, spatial=16
    img = jax.random.uniform(k_img, (2, 3, 16, 16), dtype=jnp.float32)

    # deterministic synthetic "network" parameters
    w = jax.random.normal(k_w, (3, NUM_CLASSES), dtype=jnp.float32) * 0.1
    b = jax.random.normal(k_b, (1, NUM_CLASSES), dtype=jnp.float32) * 0.01

    out = jax.block_until_ready(normalized_forward(img, w, b))

    ref = _reference(img, w, b)
    assert out.shape == (2, NUM_CLASSES)
    assert jnp.allclose(out, ref, atol=1e-4, rtol=1e-4), "mismatch vs reference"

    print("KERNEL_OK")
</pallas_src>

<mosaic_0001>
module attributes {stable_mosaic.version = 11 : i64} {
  func.func @_row_sum_kernel(%arg0: i32, %arg1: i32, %arg2: memref<24x256xf32, #tpu.memory_space<vmem>>, %arg3: memref<24x1xf32, #tpu.memory_space<vmem>>) attributes {dimension_semantics = [#tpu.dimension_semantics<parallel>, #tpu.dimension_semantics<arbitrary>], iteration_bounds = array<i64: 1, 1>, scalar_prefetch = 0 : i64, scratch_operands = 0 : i64, tpu.core_type = #tpu.core_type<tc>, window_params = [{transform_indices = @transform_0, window_bounds = array<i64: 24, 256>}, {transform_indices = @transform_1, window_bounds = array<i64: 24, 1>}]} {
    %c0_i32 = arith.constant 0 : i32
    %0 = arith.cmpi eq, %arg1, %c0_i32 : i32
    %1 = arith.extui %0 : i1 to i32
    %c0_i32_0 = arith.constant 0 : i32
    %2 = arith.cmpi ne, %1, %c0_i32_0 : i32
    scf.if %2 {
      %cst_6 = arith.constant 0.000000e+00 : f32
      %9 = vector.broadcast %cst_6 : f32 to vector<24x1xf32>
      %c0_7 = arith.constant 0 : index
      %c0_8 = arith.constant 0 : index
      %10 = vector.load %arg3[%c0_7, %c0_8] : memref<24x1xf32, #tpu.memory_space<vmem>>, vector<24x1xf32>
      tpu.vector_store %arg3[%c0_7, %c0_8], %9 {strides = array<i32>} : memref<24x1xf32, #tpu.memory_space<vmem>>, vector<24x1xf32>,
    } else {
    }
    %c0 = arith.constant 0 : index
    %c0_1 = arith.constant 0 : index
    %3 = vector.load %arg3[%c0, %c0_1] : memref<24x1xf32, #tpu.memory_space<vmem>>, vector<24x1xf32>
    %c0_2 = arith.constant 0 : index
    %c0_3 = arith.constant 0 : index
    %4 = vector.load %arg2[%c0_2, %c0_3] : memref<24x256xf32, #tpu.memory_space<vmem>>, vector<24x256xf32>
    %cst = arith.constant dense<0.000000e+00> : vector<24xf32>
    %5 = vector.multi_reduction <add>, %4, %cst [1] : vector<24x256xf32> to vector<24xf32>
    %6 = vector.shape_cast %5 : vector<24xf32> to vector<24x1xf32>
    %7 = arith.addf %3, %6 : vector<24x1xf32>
    %c0_4 = arith.constant 0 : index
    %c0_5 = arith.constant 0 : index
    %8 = vector.load %arg3[%c0_4, %c0_5] : memref<24x1xf32, #tpu.memory_space<vmem>>, vector<24x1xf32>
    tpu.vector_store %arg3[%c0_4, %c0_5], %7 {strides = array<i32>} : memref<24x1xf32, #tpu.memory_space<vmem>>, vector<24x1xf32>,
    return
  }
  func.func @transform_0(%arg0: i32, %arg1: i32) -> (i32, i32) {
    %c0_i32 = arith.constant 0 : i32
    return %arg0, %arg1 : i32, i32
  }
  func.func @transform_1(%arg0: i32, %arg1: i32) -> (i32, i32) {
    %c0_i32 = arith.constant 0 : i32
    %c0_i32_0 = arith.constant 0 : i32
    return %arg0, %c0_i32 : i32, i32
  }
}

</mosaic_0001>

<llo_original>
// kernel: tpu_custom_call.1
$region0: #{tpu_custom_call.1}
  #allocation0 [shape = 'u32[]', space=smem, size = 0x4, offset = 0x4, fixed_abs, tag = 'smem constant byte address 0x4 - core index']
  #allocation1 [shape = 'u32[144,128]{1,0:T(1,128)}', space=vmem, size = 0x12000, scoped, tag = 'internal scratch']
  %s0 = inlined_call_operand.hbm [shape: f32[24,256], index: 0, kind: input, shape index: {}]
  %s1 = inlined_call_operand.vmem [shape: f32[24,1], index: 1, kind: output, shape index: {}]
  %s2 = sld [smem:[#allocation0]]
  $region22: #{tpu_custom_call.1} parent=0
    _
  %s4 = ssub.s32 1, %s2
  %s5 = scalar_select 0, %s4, %s2
  $region1: #{tpu_custom_call.1} parent=0
    #allocation2 [shape = 'u8[24576]{0}', space=vmem, size = 0x6000, scoped, tag = 'input window, operand 0, single buffered']
    #allocation3 [shape = 's32[1]{0}', space=sflag, size = 0x4, scoped, tag = 'scoped memory for tpu_custom_call.1']
    %6 = vsyncpa [#allocation3], 0
    // Predicated region
    $region2: #{tpu_custom_call.1} parent=1 // pred_check
      _
    $region3: #{tpu_custom_call.1} parent=1 // pred_check_branch
      %8 = sbr.rel (0) target = $region5
    $region4: #{tpu_custom_call.1} parent=1 // pred_region
      %s10 = ssub.s32 768, 768
      %11 = vsyncadd [#allocation3], %s10
      %s12 = sshll.u32 [#allocation2], 4
      %s13 = int_to_ptr.vmem [resolvable:$true] %s12
      %18 = dma.hbm_to_vmem [thread:$0]  %s0, 768, %s13, [#allocation3], 256, 256, 16
    $region5: #{tpu_custom_call.1} parent=1 // pred_fallthru
      _
    // Predicated region
    $region6: #{tpu_custom_call.1} parent=1 // pred_check
      _
    $region7: #{tpu_custom_call.1} parent=1 // pred_check_branch
      %20 = sbr.rel (0) target = $region9
    $region8: #{tpu_custom_call.1} parent=1 // pred_region
      %21 = dma.done [#allocation3], 768
    $region9: #{tpu_custom_call.1} parent=1 // pred_fallthru
      _
    %p22 = scmp.eq.s32.totalorder 0, 0
    // Predicated region
    $region10: #{tpu_custom_call.1} parent=1 // pred_check
      %p23 = pneg %p22
    $region11: #{tpu_custom_call.1} parent=1 // pred_check_branch
      %25 = sbr.rel (%p23) target = $region13
    $region12: #{tpu_custom_call.1} parent=1 // pred_region
      %vm26 = vcmask 7168
      %27 = vst.msk [vmem:[%s1] sm:$0xff] %vm26, 0.0
      %28 = vst.msk [vmem:[%s1 + $0x8] sm:$0xff] %vm26, 0.0
      %29 = vst.msk [vmem:[%s1 + $0x10] sm:$0xff] %vm26, 0.0
    $region13: #{tpu_custom_call.1} parent=1 // pred_fallthru
      _
    %v30 = vld [vmem:[%s1] sm:$0xff]
    %v31 = vld [vmem:[%s1 + $0x8] sm:$0xff]
    %v32 = vld [vmem:[%s1 + $0x10] sm:$0xff]
    %v33 = vld [vmem:[#allocation2] sm:$0xff]
    %v34 = vld [vmem:[#allocation2 + $0x8] sm:$0xff]
    %v35 = vld [vmem:[#allocation2 + $0x10] sm:$0xff]
    %v36 = vld [vmem:[#allocation2 + $0x18] sm:$0xff]
    %v37 = vld [vmem:[#allocation2 + $0x20] sm:$0xff]
    %v38 = vld [vmem:[#allocation2 + $0x28] sm:$0xff]
    %v39 = vadd.f32 %v33, %v34
    %40 = vadd.xlane.f32.xlu0 %v39
    %v41 = vpop.xlane.xlu0 %40
    %v42 = vadd.f32 %v35, %v36
    %43 = vadd.xlane.f32.xlu0 %v42
    %v44 = vpop.xlane.xlu0 %43
    %v45 = vadd.f32 %v37, %v38
    %46 = vadd.xlane.f32.xlu0 %v45
    %v47 = vpop.xlane.xlu0 %46
    %v48 = vadd.f32 %v30, %v41
    %v49 = vadd.f32 %v31, %v44
    %v50 = vadd.f32 %v32, %v47
    %vm51 = vcmask 7168
    %52 = vst.msk [vmem:[%s1] sm:$0xff] %vm51, %v48
    %53 = vst.msk [vmem:[%s1 + $0x8] sm:$0xff] %vm51, %v49
    %54 = vst.msk [vmem:[%s1 + $0x10] sm:$0xff] %vm51, %v50
    // Predicated region
    $region14: #{tpu_custom_call.1} parent=1 // pred_check
      _
    $region15: #{tpu_custom_call.1} parent=1 // pred_check_branch
      %56 = sbr.rel (0) target = $region17
    $region16: #{tpu_custom_call.1} parent=1 // pred_region
      _
    $region17: #{tpu_custom_call.1} parent=1 // pred_fallthru
      _
    // Predicated region
    $region18: #{tpu_custom_call.1} parent=1 // pred_check
      _
    $region19: #{tpu_custom_call.1} parent=1 // pred_check_branch
      %58 = sbr.rel (0) target = $region21
    $region20: #{tpu_custom_call.1} parent=1 // pred_region
      _
    $region21: #{tpu_custom_call.1} parent=1 // pred_fallthru
      _
    %59 = vsyncpa [#allocation3], 1

</llo_original>
